<compile_context>
chip_gen: v7x
topology: tpu7x:2x2x1
jax: 0.10.0
libtpu: 0.0.40
codegen_flags: <defaults>
</compile_context>

<pallas_src>
import math
import functools

import jax
import jax.numpy as jnp
from jax import lax
from jax.experimental import pallas as pl
from jax.experimental.pallas import tpu as pltpu


_MIB = 1024 * 1024


def _vmem_capacity_bytes():
    """Per-core VMEM capacity; conservative (v7x-sized) fallback if unknown."""
    try:
        info = pltpu.get_tpu_info()
        cap = getattr(info, "vmem_capacity_bytes", None)
        if cap:
            return int(cap)
    except Exception:
        pass
    return 64 * _MIB  # v7x has 64 MiB / TC; v5e & v6e have 128 MiB.


def _pick_seq_tile(seq_len):
    for t in (256, 128, 64, 32, 16, 8):
        if seq_len % t == 0:
            return t
    # Full-extent block along the sequence dim is always legal (no (8,128)
    # divisibility requirement when the block equals the array dim).
    return seq_len


# --------------------------------------------------------------------------
# Fast path: token table resident in VMEM, gather via dynamic VMEM row loads.
# --------------------------------------------------------------------------
def _emb_kernel_resident(ids_ref, tok_ref, pos_ref, out_ref, *,
                         seq_len, seq_tile, vocab, scale):
    # ids_ref: (B*S,) int32 in SMEM (scalar prefetch)
    # tok_ref: (V, D) token table, VMEM-resident (constant block index)
    # pos_ref: (tS, D) positional tile
    # out_ref: (1, tS, D) output tile
    s = pl.program_id(0)
    b = pl.program_id(1)
    base = b * seq_len + s * seq_tile

    def body(i, carry):
        # TODO(synk): PyTorch nn.Embedding raises on out-of-range ids; we clamp.
        row = jnp.clip(ids_ref[base + i], 0, vocab - 1)
        tok = tok_ref[pl.ds(row, 1), :].astype(jnp.float32)   # (1, D) dyn. load
        pos = pos_ref[pl.ds(i, 1), :].astype(jnp.float32)
        out_ref[0, pl.ds(i, 1), :] = ((tok + pos) * scale).astype(out_ref.dtype)
        return carry

    lax.fori_loop(0, seq_tile, body, 0, unroll=min(8, seq_tile))


# --------------------------------------------------------------------------
# Large-vocab path: HBM table, per-row DMA gather double-buffered across steps.
# --------------------------------------------------------------------------
def _emb_kernel_hbm_gather(ids_ref, tok_hbm_ref, pos_ref, out_ref,
                           gbuf_ref, sem_ref, *,
                           seq_len, seq_tile, batch, vocab, scale):
    # gbuf_ref: (2, tS, D) VMEM — cross-grid-step double buffer of gathered rows
    # sem_ref : (2,) DMA semaphores — one shared semaphore per slot
    s = pl.program_id(0)
    b = pl.program_id(1)
    t = s * batch + b                                   # linear grid step
    total = (seq_len // seq_tile) * batch
    slot = t % 2
    unroll = min(8, seq_tile)

    def issue(step_s, step_b, sl):
        base = step_b * seq_len + step_s * seq_tile

        def body(i, carry):
            row = jnp.clip(ids_ref[base + i], 0, vocab - 1)
            pltpu.make_async_copy(
                tok_hbm_ref.at[pl.ds(row, 1), :],
                gbuf_ref.at[sl, pl.ds(i, 1), :],
                sem_ref.at[sl],
            ).start()
            return carry

        lax.fori_loop(0, seq_tile, body, 0, unroll=unroll)

    def wait(sl):
        def body(i, carry):
            pltpu.make_async_copy(
                tok_hbm_ref.at[pl.ds(0, 1), :],          # shape-only descriptor
                gbuf_ref.at[sl, pl.ds(i, 1), :],
                sem_ref.at[sl],
            ).wait()
            return carry

        lax.fori_loop(0, seq_tile, body, 0, unroll=unroll)

    # Prime the pipeline on the very first grid step.
    @pl.when(t == 0)
    def _():
        issue(s, b, slot)

    # Prefetch the NEXT grid step's rows before waiting on the current slot:
    # keeps the DMA engine busy during wait/compute/writeback, and keeps all
    # SMEM scalar reads ahead of the semaphore waits.
    @pl.when(t + 1 < total)
    def _():
        nt = t + 1
        issue(nt // batch, nt % batch, 1 - slot)

    wait(slot)

    tok = gbuf_ref[slot].astype(jnp.float32)             # (tS, D)
    pos = pos_ref[...].astype(jnp.float32)
    out_ref[0, :, :] = ((tok + pos) * scale).astype(out_ref.dtype)


# --------------------------------------------------------------------------
# Wrapper
# --------------------------------------------------------------------------
def embeddings_forward(x_ids, token_table, pos_table, *, force_hbm_gather=False):
    """x_ids: (B, S) integer token ids. Returns (B, S, d_model) in table dtype."""
    B, S = x_ids.shape
    V, D = token_table.shape
    maxlen = pos_table.shape[0]
    assert S <= maxlen, "sequence length must not exceed maxlen"

    tS = _pick_seq_tile(S)
    n_s = S // tS
    scale = math.sqrt(float(D))
    out_dtype = token_table.dtype

    # TODO(synk): scalar-prefetched ids live in SMEM; very large B*S would need
    # chunked id prefetch instead of one flat array.
    ids_flat = x_ids.astype(jnp.int32).reshape(B * S)
    pos_used = pos_table[:S]                              # only the rows we add

    tok_bytes = token_table.dtype.itemsize
    pos_bytes = pos_used.dtype.itemsize
    out_bytes = jnp.dtype(out_dtype).itemsize

    cap = _vmem_capacity_bytes()
    budget = int(cap * 0.6)                               # per-generation budget

    table_bytes = V * D * tok_bytes
    tile_bytes = tS * D * (2 * pos_bytes + 2 * out_bytes)  # double-buffered tiles
    resident_need = 2 * table_bytes + tile_bytes + 2 * _MIB
    use_resident = (not force_hbm_gather) and (resident_need <= budget)

    if use_resident:
        kernel = functools.partial(
            _emb_kernel_resident,
            seq_len=S, seq_tile=tS, vocab=V, scale=scale)
        grid_spec = pltpu.PrefetchScalarGridSpec(
            num_scalar_prefetch=1,
            grid=(n_s, B),
            in_specs=[
                pl.BlockSpec((V, D), lambda s, b, ids: (0, 0)),    # resident table
                pl.BlockSpec((tS, D), lambda s, b, ids: (s, 0)),   # pos tile
            ],
            out_specs=pl.BlockSpec((1, tS, D), lambda s, b, ids: (b, s, 0)),
        )
        vmem_limit = min(budget, max(32 * _MIB, resident_need + 4 * _MIB))
        dims = ("parallel", "parallel")
    else:
        kernel = functools.partial(
            _emb_kernel_hbm_gather,
            seq_len=S, seq_tile=tS, batch=B, vocab=V, scale=scale)
        grid_spec = pltpu.PrefetchScalarGridSpec(
            num_scalar_prefetch=1,
            grid=(n_s, B),
            in_specs=[
                pl.BlockSpec(memory_space=pl.ANY),                 # table in HBM
                pl.BlockSpec((tS, D), lambda s, b, ids: (s, 0)),   # pos tile
            ],
            out_specs=pl.BlockSpec((1, tS, D), lambda s, b, ids: (b, s, 0)),
            scratch_shapes=[
                pltpu.VMEM((2, tS, D), token_table.dtype),         # gather slots
                pltpu.SemaphoreType.DMA((2,)),                     # per-slot sems
            ],
        )
        hbm_need = 2 * tS * D * tok_bytes + tile_bytes + 2 * _MIB
        vmem_limit = min(budget, max(32 * _MIB, hbm_need + 8 * _MIB))
        # Cross-step double buffering carries state across grid steps, so the
        # grid must execute sequentially on a single core.
        dims = ("arbitrary", "arbitrary")

    return pl.pallas_call(
        kernel,
        out_shape=jax.ShapeDtypeStruct((B, S, D), out_dtype),
        grid_spec=grid_spec,
        compiler_params=pltpu.CompilerParams(
            dimension_semantics=dims,
            vmem_limit_bytes=int(vmem_limit)),
    )(ids_flat, token_table, pos_used)


if __name__ == "__main__":
    d_model = 128
    vocab = 64
    maxlen = 16
    batch = 2
    seq = 8

    key = jax.random.PRNGKey(0)
    k_tok, k_pos, k_ids = jax.random.split(key, 3)

    # nn.Embedding default init: N(0, 1)
    token_table = jax.random.normal(k_tok, (vocab, d_model), dtype=jnp.float32)
    pos_table = jax.random.normal(k_pos, (maxlen, d_model), dtype=jnp.float32)
    x = jax.random.randint(k_ids, (batch, seq), 0, vocab, dtype=jnp.int32)

    # Reference — same semantics as the PyTorch forward:
    #   (positions + tokens) * sqrt(d_model)
    ref = (token_table[x] + pos_table[:seq][None, :, :]) * math.sqrt(d_model)

    # 1) Fast path: VMEM-resident table, dynamic VMEM row gather.
    out_fast = jax.block_until_ready(embeddings_forward(x, token_table, pos_table))
    assert out_fast.shape == (batch, seq, d_model)
    assert jnp.allclose(out_fast, ref, atol=1e-4, rtol=1e-4), "resident path mismatch"

    # 2) Large-vocab path: HBM table + cross-step double-buffered row-gather DMAs.
    out_hbm = jax.block_until_ready(
        embeddings_forward(x, token_table, pos_table, force_hbm_gather=True))
    assert jnp.allclose(out_hbm, ref, atol=1e-4, rtol=1e-4), "hbm gather path mismatch"

    # 3) Sequence length not a multiple of 8 (full-extent seq block).
    seq2 = 12
    x2 = jax.random.randint(jax.random.PRNGKey(1), (batch, seq2), 0, vocab,
                            dtype=jnp.int32)
    ref2 = (token_table[x2] + pos_table[:seq2][None, :, :]) * math.sqrt(d_model)
    out2 = jax.block_until_ready(embeddings_forward(x2, token_table, pos_table))
    assert jnp.allclose(out2, ref2, atol=1e-4, rtol=1e-4), "odd seq-len mismatch"

    print("KERNEL_OK")
</pallas_src>

<mosaic_0001>
module attributes {stable_mosaic.version = 11 : i64} {
  func.func @_emb_kernel_resident(%arg0: i32, %arg1: i32, %arg2: memref<16xi32, #tpu.memory_space<smem>>, %arg3: memref<64x128xf32, #tpu.memory_space<vmem>>, %arg4: memref<8x128xf32, #tpu.memory_space<vmem>>, %arg5: memref<1x8x128xf32, #tpu.memory_space<vmem>>) attributes {dimension_semantics = [#tpu.dimension_semantics<parallel>, #tpu.dimension_semantics<parallel>], iteration_bounds = array<i64: 1, 2>, scalar_prefetch = 1 : i64, scratch_operands = 0 : i64, tpu.core_type = #tpu.core_type<tc>, window_params = [{pipeline_mode = #tpu.pipeline_mode<synchronous>, transform_indices = @transform_0, window_bounds = array<i64: 64, 128>}, {transform_indices = @transform_1, window_bounds = array<i64: 8, 128>}, {transform_indices = @transform_2, window_bounds = array<i64: 1, 8, 128>}]} {
    %c8_i32 = arith.constant 8 : i32
    %0 = arith.muli %arg1, %c8_i32 : i32
    %c8_i32_0 = arith.constant 8 : i32
    %1 = arith.muli %arg0, %c8_i32_0 : i32
    %2 = arith.addi %0, %1 : i32
    %c0_i32 = arith.constant 0 : i32
    %3 = arith.addi %2, %c0_i32 : i32
    %4 = arith.index_cast %3 : i32 to index
    %5 = memref.load %arg2[%4] : memref<16xi32, #tpu.memory_space<smem>>
    %c0_i32_1 = arith.constant 0 : i32
    %c63_i32 = arith.constant 63 : i32
    %6 = arith.maxsi %c0_i32_1, %5 : i32
    %7 = arith.minsi %c63_i32, %6 : i32
    %8 = arith.index_cast %7 : i32 to index
    %c0 = arith.constant 0 : index
    %9 = vector.load %arg3[%8, %c0] : memref<64x128xf32, #tpu.memory_space<vmem>>, vector<1x128xf32>
    %10 = arith.index_cast %c0_i32 : i32 to index
    %c0_2 = arith.constant 0 : index
    %11 = vector.load %arg4[%10, %c0_2] : memref<8x128xf32, #tpu.memory_space<vmem>>, vector<1x128xf32>
    %12 = arith.addf %9, %11 : vector<1x128xf32>
    %cst = arith.constant 11.3137083 : f32
    %13 = vector.broadcast %cst : f32 to vector<1x128xf32>
    %14 = arith.mulf %12, %13 : vector<1x128xf32>
    %c0_3 = arith.constant 0 : index
    %15 = arith.index_cast %c0_i32 : i32 to index
    %c0_4 = arith.constant 0 : index
    %16 = vector.load %arg5[%c0_3, %15, %c0_4] : memref<1x8x128xf32, #tpu.memory_space<vmem>>, vector<1x1x128xf32>
    %17 = vector.shape_cast %16 : vector<1x1x128xf32> to vector<1x128xf32>
    %18 = vector.shape_cast %14 : vector<1x128xf32> to vector<1x1x128xf32>
    tpu.vector_store %arg5[%c0_3, %15, %c0_4], %18 {strides = array<i32>} : memref<1x8x128xf32, #tpu.memory_space<vmem>>, vector<1x1x128xf32>,
    %c1_i32 = arith.constant 1 : i32
    %19 = arith.addi %2, %c1_i32 : i32
    %20 = arith.index_cast %19 : i32 to index
    %21 = memref.load %arg2[%20] : memref<16xi32, #tpu.memory_space<smem>>
    %c0_i32_5 = arith.constant 0 : i32
    %c63_i32_6 = arith.constant 63 : i32
    %22 = arith.maxsi %c0_i32_5, %21 : i32
    %23 = arith.minsi %c63_i32_6, %22 : i32
    %24 = arith.index_cast %23 : i32 to index
    %c0_7 = arith.constant 0 : index
    %25 = vector.load %arg3[%24, %c0_7] : memref<64x128xf32, #tpu.memory_space<vmem>>, vector<1x128xf32>
    %26 = arith.index_cast %c1_i32 : i32 to index
    %c0_8 = arith.constant 0 : index
    %27 = vector.load %arg4[%26, %c0_8] : memref<8x128xf32, #tpu.memory_space<vmem>>, vector<1x128xf32>
    %28 = arith.addf %25, %27 : vector<1x128xf32>
    %cst_9 = arith.constant 11.3137083 : f32
    %29 = vector.broadcast %cst_9 : f32 to vector<1x128xf32>
    %30 = arith.mulf %28, %29 : vector<1x128xf32>
    %c0_10 = arith.constant 0 : index
    %31 = arith.index_cast %c1_i32 : i32 to index
    %c0_11 = arith.constant 0 : index
    %32 = vector.load %arg5[%c0_10, %31, %c0_11] : memref<1x8x128xf32, #tpu.memory_space<vmem>>, vector<1x1x128xf32>
    %33 = vector.shape_cast %32 : vector<1x1x128xf32> to vector<1x128xf32>
    %34 = vector.shape_cast %30 : vector<1x128xf32> to vector<1x1x128xf32>
    tpu.vector_store %arg5[%c0_10, %31, %c0_11], %34 {strides = array<i32>} : memref<1x8x128xf32, #tpu.memory_space<vmem>>, vector<1x1x128xf32>,
    %c2_i32 = arith.constant 2 : i32
    %35 = arith.addi %2, %c2_i32 : i32
    %36 = arith.index_cast %35 : i32 to index
    %37 = memref.load %arg2[%36] : memref<16xi32, #tpu.memory_space<smem>>
    %c0_i32_12 = arith.constant 0 : i32
    %c63_i32_13 = arith.constant 63 : i32
    %38 = arith.maxsi %c0_i32_12, %37 : i32
    %39 = arith.minsi %c63_i32_13, %38 : i32
    %40 = arith.index_cast %39 : i32 to index
    %c0_14 = arith.constant 0 : index
    %41 = vector.load %arg3[%40, %c0_14] : memref<64x128xf32, #tpu.memory_space<vmem>>, vector<1x128xf32>
    %42 = arith.index_cast %c2_i32 : i32 to index
    %c0_15 = arith.constant 0 : index
    %43 = vector.load %arg4[%42, %c0_15] : memref<8x128xf32, #tpu.memory_space<vmem>>, vector<1x128xf32>
    %44 = arith.addf %41, %43 : vector<1x128xf32>
    %cst_16 = arith.constant 11.3137083 : f32
    %45 = vector.broadcast %cst_16 : f32 to vector<1x128xf32>
    %46 = arith.mulf %44, %45 : vector<1x128xf32>
    %c0_17 = arith.constant 0 : index
    %47 = arith.index_cast %c2_i32 : i32 to index
    %c0_18 = arith.constant 0 : index
    %48 = vector.load %arg5[%c0_17, %47, %c0_18] : memref<1x8x128xf32, #tpu.memory_space<vmem>>, vector<1x1x128xf32>
    %49 = vector.shape_cast %48 : vector<1x1x128xf32> to vector<1x128xf32>
    %50 = vector.shape_cast %46 : vector<1x128xf32> to vector<1x1x128xf32>
    tpu.vector_store %arg5[%c0_17, %47, %c0_18], %50 {strides = array<i32>} : memref<1x8x128xf32, #tpu.memory_space<vmem>>, vector<1x1x128xf32>,
    %c3_i32 = arith.constant 3 : i32
    %51 = arith.addi %2, %c3_i32 : i32
    %52 = arith.index_cast %51 : i32 to index
    %53 = memref.load %arg2[%52] : memref<16xi32, #tpu.memory_space<smem>>
    %c0_i32_19 = arith.constant 0 : i32
    %c63_i32_20 = arith.constant 63 : i32
    %54 = arith.maxsi %c0_i32_19, %53 : i32
    %55 = arith.minsi %c63_i32_20, %54 : i32
    %56 = arith.index_cast %55 : i32 to index
    %c0_21 = arith.constant 0 : index
    %57 = vector.load %arg3[%56, %c0_21] : memref<64x128xf32, #tpu.memory_space<vmem>>, vector<1x128xf32>
    %58 = arith.index_cast %c3_i32 : i32 to index
    %c0_22 = arith.constant 0 : index
    %59 = vector.load %arg4[%58, %c0_22] : memref<8x128xf32, #tpu.memory_space<vmem>>, vector<1x128xf32>
    %60 = arith.addf %57, %59 : vector<1x128xf32>
    %cst_23 = arith.constant 11.3137083 : f32
    %61 = vector.broadcast %cst_23 : f32 to vector<1x128xf32>
    %62 = arith.mulf %60, %61 : vector<1x128xf32>
    %c0_24 = arith.constant 0 : index
    %63 = arith.index_cast %c3_i32 : i32 to index
    %c0_25 = arith.constant 0 : index
    %64 = vector.load %arg5[%c0_24, %63, %c0_25] : memref<1x8x128xf32, #tpu.memory_space<vmem>>, vector<1x1x128xf32>
    %65 = vector.shape_cast %64 : vector<1x1x128xf32> to vector<1x128xf32>
    %66 = vector.shape_cast %62 : vector<1x128xf32> to vector<1x1x128xf32>
    tpu.vector_store %arg5[%c0_24, %63, %c0_25], %66 {strides = array<i32>} : memref<1x8x128xf32, #tpu.memory_space<vmem>>, vector<1x1x128xf32>,
    %c4_i32 = arith.constant 4 : i32
    %67 = arith.addi %2, %c4_i32 : i32
    %68 = arith.index_cast %67 : i32 to index
    %69 = memref.load %arg2[%68] : memref<16xi32, #tpu.memory_space<smem>>
    %c0_i32_26 = arith.constant 0 : i32
    %c63_i32_27 = arith.constant 63 : i32
    %70 = arith.maxsi %c0_i32_26, %69 : i32
    %71 = arith.minsi %c63_i32_27, %70 : i32
    %72 = arith.index_cast %71 : i32 to index
    %c0_28 = arith.constant 0 : index
    %73 = vector.load %arg3[%72, %c0_28] : memref<64x128xf32, #tpu.memory_space<vmem>>, vector<1x128xf32>
    %74 = arith.index_cast %c4_i32 : i32 to index
    %c0_29 = arith.constant 0 : index
    %75 = vector.load %arg4[%74, %c0_29] : memref<8x128xf32, #tpu.memory_space<vmem>>, vector<1x128xf32>
    %76 = arith.addf %73, %75 : vector<1x128xf32>
    %cst_30 = arith.constant 11.3137083 : f32
    %77 = vector.broadcast %cst_30 : f32 to vector<1x128xf32>
    %78 = arith.mulf %76, %77 : vector<1x128xf32>
    %c0_31 = arith.constant 0 : index
    %79 = arith.index_cast %c4_i32 : i32 to index
    %c0_32 = arith.constant 0 : index
    %80 = vector.load %arg5[%c0_31, %79, %c0_32] : memref<1x8x128xf32, #tpu.memory_space<vmem>>, vector<1x1x128xf32>
    %81 = vector.shape_cast %80 : vector<1x1x128xf32> to vector<1x128xf32>
    %82 = vector.shape_cast %78 : vector<1x128xf32> to vector<1x1x128xf32>
    tpu.vector_store %arg5[%c0_31, %79, %c0_32], %82 {strides = array<i32>} : memref<1x8x128xf32, #tpu.memory_space<vmem>>, vector<1x1x128xf32>,
    %c5_i32 = arith.constant 5 : i32
    %83 = arith.addi %2, %c5_i32 : i32
    %84 = arith.index_cast %83 : i32 to index
    %85 = memref.load %arg2[%84] : memref<16xi32, #tpu.memory_space<smem>>
    %c0_i32_33 = arith.constant 0 : i32
    %c63_i32_34 = arith.constant 63 : i32
    %86 = arith.maxsi %c0_i32_33, %85 : i32
    %87 = arith.minsi %c63_i32_34, %86 : i32
    %88 = arith.index_cast %87 : i32 to index
    %c0_35 = arith.constant 0 : index
    %89 = vector.load %arg3[%88, %c0_35] : memref<64x128xf32, #tpu.memory_space<vmem>>, vector<1x128xf32>
    %90 = arith.index_cast %c5_i32 : i32 to index
    %c0_36 = arith.constant 0 : index
    %91 = vector.load %arg4[%90, %c0_36] : memref<8x128xf32, #tpu.memory_space<vmem>>, vector<1x128xf32>
    %92 = arith.addf %89, %91 : vector<1x128xf32>
    %cst_37 = arith.constant 11.3137083 : f32
    %93 = vector.broadcast %cst_37 : f32 to vector<1x128xf32>
    %94 = arith.mulf %92, %93 : vector<1x128xf32>
    %c0_38 = arith.constant 0 : index
    %95 = arith.index_cast %c5_i32 : i32 to index
    %c0_39 = arith.constant 0 : index
    %96 = vector.load %arg5[%c0_38, %95, %c0_39] : memref<1x8x128xf32, #tpu.memory_space<vmem>>, vector<1x1x128xf32>
    %97 = vector.shape_cast %96 : vector<1x1x128xf32> to vector<1x128xf32>
    %98 = vector.shape_cast %94 : vector<1x128xf32> to vector<1x1x128xf32>
    tpu.vector_store %arg5[%c0_38, %95, %c0_39], %98 {strides = array<i32>} : memref<1x8x128xf32, #tpu.memory_space<vmem>>, vector<1x1x128xf32>,
    %c6_i32 = arith.constant 6 : i32
    %99 = arith.addi %2, %c6_i32 : i32
    %100 = arith.index_cast %99 : i32 to index
    %101 = memref.load %arg2[%100] : memref<16xi32, #tpu.memory_space<smem>>
    %c0_i32_40 = arith.constant 0 : i32
    %c63_i32_41 = arith.constant 63 : i32
    %102 = arith.maxsi %c0_i32_40, %101 : i32
    %103 = arith.minsi %c63_i32_41, %102 : i32
    %104 = arith.index_cast %103 : i32 to index
    %c0_42 = arith.constant 0 : index
    %105 = vector.load %arg3[%104, %c0_42] : memref<64x128xf32, #tpu.memory_space<vmem>>, vector<1x128xf32>
    %106 = arith.index_cast %c6_i32 : i32 to index
    %c0_43 = arith.constant 0 : index
    %107 = vector.load %arg4[%106, %c0_43] : memref<8x128xf32, #tpu.memory_space<vmem>>, vector<1x128xf32>
    %108 = arith.addf %105, %107 : vector<1x128xf32>
    %cst_44 = arith.constant 11.3137083 : f32
    %109 = vector.broadcast %cst_44 : f32 to vector<1x128xf32>
    %110 = arith.mulf %108, %109 : vector<1x128xf32>
    %c0_45 = arith.constant 0 : index
    %111 = arith.index_cast %c6_i32 : i32 to index
    %c0_46 = arith.constant 0 : index
    %112 = vector.load %arg5[%c0_45, %111, %c0_46] : memref<1x8x128xf32, #tpu.memory_space<vmem>>, vector<1x1x128xf32>
    %113 = vector.shape_cast %112 : vector<1x1x128xf32> to vector<1x128xf32>
    %114 = vector.shape_cast %110 : vector<1x128xf32> to vector<1x1x128xf32>
    tpu.vector_store %arg5[%c0_45, %111, %c0_46], %114 {strides = array<i32>} : memref<1x8x128xf32, #tpu.memory_space<vmem>>, vector<1x1x128xf32>,
    %c7_i32 = arith.constant 7 : i32
    %115 = arith.addi %2, %c7_i32 : i32
    %116 = arith.index_cast %115 : i32 to index
    %117 = memref.load %arg2[%116] : memref<16xi32, #tpu.memory_space<smem>>
    %c0_i32_47 = arith.constant 0 : i32
    %c63_i32_48 = arith.constant 63 : i32
    %118 = arith.maxsi %c0_i32_47, %117 : i32
    %119 = arith.minsi %c63_i32_48, %118 : i32
    %120 = arith.index_cast %119 : i32 to index
    %c0_49 = arith.constant 0 : index
    %121 = vector.load %arg3[%120, %c0_49] : memref<64x128xf32, #tpu.memory_space<vmem>>, vector<1x128xf32>
    %122 = arith.index_cast %c7_i32 : i32 to index
    %c0_50 = arith.constant 0 : index
    %123 = vector.load %arg4[%122, %c0_50] : memref<8x128xf32, #tpu.memory_space<vmem>>, vector<1x128xf32>
    %124 = arith.addf %121, %123 : vector<1x128xf32>
    %cst_51 = arith.constant 11.3137083 : f32
    %125 = vector.broadcast %cst_51 : f32 to vector<1x128xf32>
    %126 = arith.mulf %124, %125 : vector<1x128xf32>
    %c0_52 = arith.constant 0 : index
    %127 = arith.index_cast %c7_i32 : i32 to index
    %c0_53 = arith.constant 0 : index
    %128 = vector.load %arg5[%c0_52, %127, %c0_53] : memref<1x8x128xf32, #tpu.memory_space<vmem>>, vector<1x1x128xf32>
    %129 = vector.shape_cast %128 : vector<1x1x128xf32> to vector<1x128xf32>
    %130 = vector.shape_cast %126 : vector<1x128xf32> to vector<1x1x128xf32>
    tpu.vector_store %arg5[%c0_52, %127, %c0_53], %130 {strides = array<i32>} : memref<1x8x128xf32, #tpu.memory_space<vmem>>, vector<1x1x128xf32>,
    %c8_i32_54 = arith.constant 8 : i32
    return
  }
  func.func @transform_0(%arg0: i32, %arg1: i32, %arg2: memref<16xi32, #tpu.memory_space<smem>>) -> (i32, i32) {
    %c0_i32 = arith.constant 0 : i32
    %c0_i32_0 = arith.constant 0 : i32
    %c0_i32_1 = arith.constant 0 : i32
    return %c0_i32, %c0_i32_0 : i32, i32
  }
  func.func @transform_1(%arg0: i32, %arg1: i32, %arg2: memref<16xi32, #tpu.memory_space<smem>>) -> (i32, i32) {
    %c0_i32 = arith.constant 0 : i32
    %c0_i32_0 = arith.constant 0 : i32
    return %arg0, %c0_i32 : i32, i32
  }
  func.func @transform_2(%arg0: i32, %arg1: i32, %arg2: memref<16xi32, #tpu.memory_space<smem>>) -> (i32, i32, i32) {
    %c0_i32 = arith.constant 0 : i32
    %c0_i32_0 = arith.constant 0 : i32
    return %arg1, %arg0, %c0_i32 : i32, i32, i32
  }
}

</mosaic_0001>

<llo_original>
// kernel: tpu_custom_call.1
$region0: #{tpu_custom_call.1}
  #allocation0 [shape = 'u32[]', space=smem, size = 0x4, offset = 0x4, fixed_abs, tag = 'smem constant byte address 0x4 - core index']
  #allocation1 [shape = 'u32[144,128]{1,0:T(1,128)}', space=vmem, size = 0x12000, scoped, tag = 'internal scratch']
  #allocation2 [shape = 's32[1]{0}', space=sflag, size = 0x4, scoped, tag = 'scoped memory for tpu_custom_call.1']
  #allocation3 [shape = 'u8[512]{0}', space=smem, size = 0x200, scoped, tag = 'prefetched SMEM operand 0']
  %s0 = inlined_call_operand.hbm [shape: s32[16], index: 0, kind: input, shape index: {}]
  %s1 = inlined_call_operand.hbm [shape: f32[64,128], index: 1, kind: input, shape index: {}]
  %s2 = inlined_call_operand.hbm [shape: f32[8,128], index: 2, kind: input, shape index: {}]
  %s3 = inlined_call_operand.hbm [shape: f32[2,8,128], index: 3, kind: output, shape index: {}]
  %s4 = sld [smem:[#allocation0]]
  $region49: #{tpu_custom_call.1} parent=0
    _
  %s6 = ssub.s32 1, %s4
  %s7 = scalar_select 0, %s6, %s4
  %9 = dma.hbm_to_smem %s0, 16, [#allocation3], [#allocation2]
  %10 = dma.done [#allocation2], 16
  %11 = sfence
  $region1: #{tpu_custom_call.1} parent=0
    #allocation4 [shape = 'u8[32768]{0}', space=vmem, size = 0x8000, scoped, tag = 'input window, operand 1, single buffered']
    #allocation5 [shape = 's32[2]{0}', space=sflag, size = 0x8, scoped, tag = 'scoped memory for tpu_custom_call.1']
    #allocation6 [shape = 's32[2]{0}', space=sflag, size = 0x8, scoped, tag = 'scoped memory for tpu_custom_call.1']
    #allocation7 [shape = 'u8[4096]{0}', space=vmem, size = 0x1000, scoped, tag = 'input window, operand 2, single buffered']
    #allocation8 [shape = 's32[1]{0}', space=sflag, size = 0x4, scoped, tag = 'scoped memory for tpu_custom_call.1']
    #allocation9 [shape = 'u8[8192]{0}', space=vmem, size = 0x2000, scoped, tag = 'output window, operand 0']
    %12 = vsyncpa [#allocation5], 0
    %13 = vsyncpa [#allocation8], 0
    %14 = vsyncpa [#allocation6], 0
    %s15 = scalar_lea.sflag [#allocation6], 1
    %16 = vsyncpa %s15, 0
    loop: start=0, step=1, limit=4
    $region2: #{tpu_custom_call.1} parent=1 // loop_pre_header
      _
    $region3: #{tpu_custom_call.1} parent=1 // loop_header
      %s18 = sphi 0, %s22
      %p19 = scmp.ge.s32.totalorder %s18, 4
      %s25 = sphi 0, %s37
      %s26 = sphi 0, %s33
      %s27 = sphi 0, %s25
      %s28 = sphi 0, %s26
      %s29 = sphi 0, %s27
      %s30 = sphi 0, %s28
      %s38 = sphi 0, %s38
      %s40 = sphi 0, %s38
      %s41 = sphi 0, %s40
      %s55 = sphi 0, %s41
      %s61 = sphi 0, %s63
      %s64 = sphi 0, %s61
      %s65 = sphi 0, %s64
      %s81 = sphi 0, %s65
      %s89 = sphi 0, %s91
      %s92 = sphi 0, %s89
      %s93 = sphi 0, %s92
      %s109 = sphi 0, %s93
    $region4: #{tpu_custom_call.1} parent=1 // loop_header_branch
      %21 = sbr.rel (%p19) target = $region8
    $region5: #{tpu_custom_call.1} parent=1 // loop_body
      %s23 = ssub.s32 %s18, 1
      %s24 = ssub.s32 %s18, 2
      %s31 = sadd.s32 1, %s26
      %p32 = scmp.ge.s32.totalorder %s31, 2
      %s33 = scalar_select %p32, 0, %s31
      %s34 = sadd.s32 1, %s25
      %s35 = scalar_select %p32, %s34, %s25
      %p36 = scmp.ge.s32.totalorder %s35, 1
      %s37 = scalar_select %p36, 0, %s35
      %s39 = sadd.s32 %s38, 1
      %p42 = scmp.eq.s32.totalorder %s18, 1
      %p43 = scmp.ne.s32.totalorder %s38, %s40
      %p44 = scmp.eq.s32.totalorder %s18, 0
      %p45 = por %p43, %p44
      %p46 = scmp.ne.s32.totalorder %s38, %s40
      %p47 = scmp.eq.s32.totalorder %s23, 1
      %p48 = por %p46, %p47
      %p49 = scmp.ne.s32.totalorder %s40, %s41
      %p50 = scmp.eq.s32.totalorder %s23, 0
      %p51 = por %p49, %p50
      %p52 = scmp.ne.s32.totalorder %s40, %s41
      %p53 = scmp.eq.s32.totalorder %s24, 1
      %p54 = por %p52, %p53
      %p56 = scmp.ne.s32.totalorder %s41, %s55
      %p57 = scmp.eq.s32.totalorder %s24, 0
      %p58 = por %p56, %p57
      %s59 = ssub.s32 %s25, %s37
      %p60 = scmp.eq.s32.totalorder %s59, 0
      %s62 = sadd.s32 %s61, 1
      %s63 = scalar_select %p60, %s61, %s62
      %p66 = pneg %p60
      %p67 = scmp.eq.s32.totalorder %s18, 1
      %p68 = por %p66, %p67
      %p69 = scmp.ne.s32.totalorder %s61, %s64
      %p70 = scmp.eq.s32.totalorder %s18, 0
      %p71 = por %p69, %p70
      %p72 = scmp.ne.s32.totalorder %s61, %s64
      %p73 = scmp.eq.s32.totalorder %s23, 1
      %p74 = por %p72, %p73
      %p75 = scmp.ne.s32.totalorder %s64, %s65
      %p76 = scmp.eq.s32.totalorder %s23, 0
      %p77 = por %p75, %p76
      %p78 = scmp.ne.s32.totalorder %s64, %s65
      %p79 = scmp.eq.s32.totalorder %s24, 1
      %p80 = por %p78, %p79
      %p82 = scmp.ne.s32.totalorder %s65, %s81
      %p83 = scmp.eq.s32.totalorder %s24, 0
      %p84 = por %p82, %p83
      %s85 = ssub.s32 %s26, %s33
      %s86 = ssub.s32 %s25, %s37
      %s87 = sor.u32 %s85, %s86
      %p88 = scmp.eq.s32.totalorder %s87, 0
      %s90 = sadd.s32 %s89, 1
      %s91 = scalar_select %p88, %s89, %s90
      %p94 = pneg %p88
      %p95 = scmp.eq.s32.totalorder %s18, 1
      %p96 = por %p94, %p95
      %p97 = scmp.ne.s32.totalorder %s89, %s92
      %p98 = scmp.eq.s32.totalorder %s18, 0
      %p99 = por %p97, %p98
      %p100 = scmp.ne.s32.totalorder %s89, %s92
      %p101 = scmp.eq.s32.totalorder %s23, 1
      %p102 = por %p100, %p101
      %p103 = scmp.ne.s32.totalorder %s92, %s93
      %p104 = scmp.eq.s32.totalorder %s23, 0
      %p105 = por %p103, %p104
      %p106 = scmp.ne.s32.totalorder %s92, %s93
      %p107 = scmp.eq.s32.totalorder %s24, 1
      %p108 = por %p106, %p107
      %p110 = scmp.ne.s32.totalorder %s93, %s109
      %p111 = scmp.eq.s32.totalorder %s24, 0
      %p112 = por %p110, %p111
      %p113 = scmp.le.s32.totalorder 1, %s18
      %p114 = scmp.lt.s32.totalorder %s18, 3
      %p115 = pnand %p113, %p114
      %p116 = pneg %p115
      // Predicated region
      $region9: #{tpu_custom_call.1} parent=5 // pred_check
        _
      $region10: #{tpu_custom_call.1} parent=5 // pred_check_branch
        %118 = sbr.rel (%p115) target = $region12
      $region11: #{tpu_custom_call.1} parent=5 // pred_region
        %s119 = ssub.s32 %s18, 1
        // Predicated region
        $region13: #{tpu_custom_call.1} parent=11 // pred_check
          %p120 = pneg %p51
        $region14: #{tpu_custom_call.1} parent=11 // pred_check_branch
          %122 = sbr.rel (%p120) target = $region16
        $region15: #{tpu_custom_call.1} parent=11 // pred_region
          %s124 = ssub.s32 1024, 1024
          %125 = vsyncadd [#allocation5], %s124
          %s126 = sshll.u32 [#allocation4], 4
          %s127 = int_to_ptr.vmem [resolvable:$true] %s126
          %132 = dma.hbm_to_vmem [thread:$0]  %s1, 1024, %s127, [#allocation5], 128, 128, 8
        $region16: #{tpu_custom_call.1} parent=11 // pred_fallthru
          _
        // Predicated region
        $region17: #{tpu_custom_call.1} parent=11 // pred_check
          %p133 = pneg %p77
        $region18: #{tpu_custom_call.1} parent=11 // pred_check_branch
          %135 = sbr.rel (%p133) target = $region20
        $region19: #{tpu_custom_call.1} parent=11 // pred_region
          %s137 = ssub.s32 128, 128
          %138 = vsyncadd [#allocation8], %s137
          %s139 = smul.addr %s27, 128
          %s140 = scalar_lea.hbm %s2, %s139
          %s142 = sshll.u32 [#allocation7], 4
          %s143 = int_to_ptr.vmem [resolvable:$true] %s142
          %145 = dma.hbm_to_vmem [thread:$0]  %s140, 128, %s143, [#allocation8]
        $region20: #{tpu_custom_call.1} parent=11 // pred_fallthru
          _
      $region12: #{tpu_custom_call.1} parent=5 // pred_fallthru
        _
      %p146 = scmp.lt.s32.totalorder %s18, 2
      // Predicated region
      $region21: #{tpu_custom_call.1} parent=5 // pred_check
        %p147 = pneg %p146
      $region22: #{tpu_custom_call.1} parent=5 // pred_check_branch
        %149 = sbr.rel (%p147) target = $region24
      $region23: #{tpu_custom_call.1} parent=5 // pred_region
        _
      $region24: #{tpu_custom_call.1} parent=5 // pred_fallthru
        _
      %p150 = scmp.le.s32.totalorder 1, %s18
      %p151 = scmp.lt.s32.totalorder %s18, 3
      %p152 = pnand %p150, %p151
      %p153 = pneg %p152
      // Predicated region
      $region25: #{tpu_custom_call.1} parent=5 // pred_check
        _
      $region26: #{tpu_custom_call.1} parent=5 // pred_check_branch
        %155 = sbr.rel (%p152) target = $region28
      $region27: #{tpu_custom_call.1} parent=5 // pred_region
        %s156 = ssub.s32 %s18, 1
        // Predicated region
        $region29: #{tpu_custom_call.1} parent=27 // pred_check
          %p157 = pneg %p51
        $region30: #{tpu_custom_call.1} parent=27 // pred_check_branch
          %159 = sbr.rel (%p157) target = $region32
        $region31: #{tpu_custom_call.1} parent=27 // pred_region
          %160 = dma.done [#allocation5], 1024
        $region32: #{tpu_custom_call.1} parent=27 // pred_fallthru
          _
        // Predicated region
        $region33: #{tpu_custom_call.1} parent=27 // pred_check
          %p161 = pneg %p77
        $region34: #{tpu_custom_call.1} parent=27 // pred_check_branch
          %163 = sbr.rel (%p161) target = $region36
        $region35: #{tpu_custom_call.1} parent=27 // pred_region
          %164 = dma.done [#allocation8], 128
        $region36: #{tpu_custom_call.1} parent=27 // pred_fallthru
          _
        %p165 = pneg %p51
        %p166 = pneg %p48
        %p167 = pneg %p77
        %p168 = pneg %p74
        %p169 = pneg %p105
        %p170 = pneg %p102
        %s171 = sand.u32 %s92, 1
        %s172 = scalar_lea.sflag [#allocation6], %s171
        %s173 = sand.u32 %s92, 1
        %s174 = smul.addr %s173, 8
        %s175 = scalar_lea.vmem [#allocation9], %s174
        %s176 = smul.u32 %s28, 8
        %s177 = smul.u32 %s27, 8
        %s178 = sadd.s32 %s176, %s177
        %s179 = sld [smem:[#allocation3 + %s178]]
        %p180 = scmp.gt.s32.totalorder %s179, 0
        %s181 = scalar_select %p180, %s179, 0
        %p182 = scmp.lt.s32.totalorder %s181, 63
        %s183 = scalar_select %p182, %s181, 63
        %s184 = scalar_lea.vmem [#allocation4], %s183
        %v185 = vld [vmem:[%s184] sm:$0x1]
        %v186 = vld [vmem:[#allocation7] sm:$0x1]
        %v187 = vadd.f32 %v185, %v186
        %v188 = vmul.f32 %v187, 11.313708
        %189 = vst [vmem:[%s175] sm:$0x1] %v188
        %s190 = sadd.s32 %s178, 1
        %s191 = sld [smem:[#allocation3 + %s190]]
        %p192 = scmp.gt.s32.totalorder %s191, 0
        %s193 = scalar_select %p192, %s191, 0
        %p194 = scmp.lt.s32.totalorder %s193, 63
        %s195 = scalar_select %p194, %s193, 63
        %s196 = scalar_lea.vmem [#allocation4], %s195
        %v197 = vld [vmem:[%s196] sm:$0x1]
        %v198 = vld [vmem:[#allocation7 + $0x1] sm:$0x1]
        %v199 = vadd.f32 %v197, %v198
        %v200 = vmul.f32 %v199, 11.313708
        %201 = vst [vmem:[%s175 + $0x1] sm:$0x1] %v200
        %s202 = sadd.s32 %s178, 2
        %s203 = sld [smem:[#allocation3 + %s202]]
        %p204 = scmp.gt.s32.totalorder %s203, 0
        %s205 = scalar_select %p204, %s203, 0
        %p206 = scmp.lt.s32.totalorder %s205, 63
        %s207 = scalar_select %p206, %s205, 63
        %s208 = scalar_lea.vmem [#allocation4], %s207
        %v209 = vld [vmem:[%s208] sm:$0x1]
        %v210 = vld [vmem:[#allocation7 + $0x2] sm:$0x1]
        %v211 = vadd.f32 %v209, %v210
        %v212 = vmul.f32 %v211, 11.313708
        %213 = vst [vmem:[%s175 + $0x2] sm:$0x1] %v212
        %s214 = sadd.s32 %s178, 3
        %s215 = sld [smem:[#allocation3 + %s214]]
        %p216 = scmp.gt.s32.totalorder %s215, 0
        %s217 = scalar_select %p216, %s215, 0
        %p218 = scmp.lt.s32.totalorder %s217, 63
        %s219 = scalar_select %p218, %s217, 63
        %s220 = scalar_lea.vmem [#allocation4], %s219
        %v221 = vld [vmem:[%s220] sm:$0x1]
        %v222 = vld [vmem:[#allocation7 + $0x3] sm:$0x1]
        %v223 = vadd.f32 %v221, %v222
        %v224 = vmul.f32 %v223, 11.313708
        %225 = vst [vmem:[%s175 + $0x3] sm:$0x1] %v224
        %s226 = sadd.s32 %s178, 4
        %s227 = sld [smem:[#allocation3 + %s226]]
        %p228 = scmp.gt.s32.totalorder %s227, 0
        %s229 = scalar_select %p228, %s227, 0
        %p230 = scmp.lt.s32.totalorder %s229, 63
        %s231 = scalar_select %p230, %s229, 63
        %s232 = scalar_lea.vmem [#allocation4], %s231
        %v233 = vld [vmem:[%s232] sm:$0x1]
        %v234 = vld [vmem:[#allocation7 + $0x4] sm:$0x1]
        %v235 = vadd.f32 %v233, %v234
        %v236 = vmul.f32 %v235, 11.313708
        %237 = vst [vmem:[%s175 + $0x4] sm:$0x1] %v236
        %s238 = sadd.s32 %s178, 5
        %s239 = sld [smem:[#allocation3 + %s238]]
        %p240 = scmp.gt.s32.totalorder %s239, 0
        %s241 = scalar_select %p240, %s239, 0
        %p242 = scmp.lt.s32.totalorder %s241, 63
        %s243 = scalar_select %p242, %s241, 63
        %s244 = scalar_lea.vmem [#allocation4], %s243
        %v245 = vld [vmem:[%s244] sm:$0x1]
        %v246 = vld [vmem:[#allocation7 + $0x5] sm:$0x1]
        %v247 = vadd.f32 %v245, %v246
        %v248 = vmul.f32 %v247, 11.313708
        %249 = vst [vmem:[%s175 + $0x5] sm:$0x1] %v248
        %s250 = sadd.s32 %s178, 6
        %s251 = sld [smem:[#allocation3 + %s250]]
        %p252 = scmp.gt.s32.totalorder %s251, 0
        %s253 = scalar_select %p252, %s251, 0
        %p254 = scmp.lt.s32.totalorder %s253, 63
        %s255 = scalar_select %p254, %s253, 63
        %s256 = scalar_lea.vmem [#allocation4], %s255
        %v257 = vld [vmem:[%s256] sm:$0x1]
        %v258 = vld [vmem:[#allocation7 + $0x6] sm:$0x1]
        %v259 = vadd.f32 %v257, %v258
        %v260 = vmul.f32 %v259, 11.313708
        %261 = vst [vmem:[%s175 + $0x6] sm:$0x1] %v260
        %s262 = sadd.s32 %s178, 7
        %s263 = sld [smem:[#allocation3 + %s262]]
        %p264 = scmp.gt.s32.totalorder %s263, 0
        %s265 = scalar_select %p264, %s263, 0
        %p266 = scmp.lt.s32.totalorder %s265, 63
        %s267 = scalar_select %p266, %s265, 63
        %s268 = scalar_lea.vmem [#allocation4], %s267
        %v269 = vld [vmem:[%s268] sm:$0x1]
        %v270 = vld [vmem:[#allocation7 + $0x7] sm:$0x1]
        %v271 = vadd.f32 %v269, %v270
        %v272 = vmul.f32 %v271, 11.313708
        %273 = vst [vmem:[%s175 + $0x7] sm:$0x1] %v272
        %s274 = sand.u32 %s92, 1
        %s275 = scalar_lea.sflag [#allocation6], %s274
        %s276 = sand.u32 %s92, 1
        %s277 = smul.addr %s276, 8
        %s278 = scalar_lea.vmem [#allocation9], %s277
        // Predicated region
        $region37: #{tpu_custom_call.1} parent=27 // pred_check
          %p279 = pneg %p102
        $region38: #{tpu_custom_call.1} parent=27 // pred_check_branch
          %281 = sbr.rel (%p279) target = $region40
        $region39: #{tpu_custom_call.1} parent=27 // pred_region
          %s283 = ssub.s32 128, 128
          %284 = vsyncadd %s275, %s283
          %s285 = sadd.s32 %s27, %s28
          %s286 = smul.addr %s285, 128
          %s287 = scalar_lea.hbm %s3, %s286
          %s289 = sshll.u32 %s278, 4
          %s290 = int_to_ptr.vmem [resolvable:$true] %s289
          %292 = dma.vmem_to_hbm [thread:$0]  %s290, 128, %s287, %s275
        $region40: #{tpu_custom_call.1} parent=27 // pred_fallthru
          _
      $region28: #{tpu_custom_call.1} parent=5 // pred_fallthru
        _
      %p293 = scmp.le.s32.totalorder 2, %s18
      // Predicated region
      $region41: #{tpu_custom_call.1} parent=5 // pred_check
        %p294 = pneg %p293
      $region42: #{tpu_custom_call.1} parent=5 // pred_check_branch
        %296 = sbr.rel (%p294) target = $region44
      $region43: #{tpu_custom_call.1} parent=5 // pred_region
        %s297 = ssub.s32 %s18, 2
        // Predicated region
        $region45: #{tpu_custom_call.1} parent=43 // pred_check
          %p298 = pneg %p108
        $region46: #{tpu_custom_call.1} parent=43 // pred_check_branch
          %300 = sbr.rel (%p298) target = $region48
        $region47: #{tpu_custom_call.1} parent=43 // pred_region
          %s301 = sand.u32 %s93, 1
          %s302 = scalar_lea.sflag [#allocation6], %s301
          %s303 = sand.u32 %s93, 1
          %s304 = smul.addr %s303, 8
          %s305 = scalar_lea.vmem [#allocation9], %s304
          %306 = dma.done %s302, 128
        $region48: #{tpu_custom_call.1} parent=43 // pred_fallthru
          _
      $region44: #{tpu_custom_call.1} parent=5 // pred_fallthru
        _
    $region6: #{tpu_custom_call.1} parent=1 // loop_footer
      %s22 = sadd.s32 1, %s18
    $region7: #{tpu_custom_call.1} parent=1 // loop_footer_branch
      %17 = sbr.rel target = $region3
    $region8: #{tpu_custom_call.1} parent=1 // loop_exit
      _
    %307 = vsyncpa [#allocation5], 1
    %s308 = scalar_lea.sflag [#allocation5], 1
    %309 = vsyncpa %s308, 1
    %310 = vsyncpa [#allocation8], 1
    %311 = vsyncpa [#allocation6], 1
    %s312 = scalar_lea.sflag [#allocation6], 1
    %313 = vsyncpa %s312, 1

</llo_original>
